<compile_context>
chip_gen: v7x
topology: tpu7x:2x2x1
jax: 0.10.0
libtpu: 0.0.40
codegen_flags: <defaults>
</compile_context>

<pallas_src>
import math
import functools

import jax
import jax.numpy as jnp
from jax.experimental import pallas as pl
from jax.experimental.pallas import tpu as pltpu


def _round_up(x, m):
    return ((x + m - 1) // m) * m


def _pad_dims(d_model, dim):
    """Lane-dense padded feature dims; dim_p is made tileable by 512 when column tiling kicks in."""
    d_p = _round_up(d_model, 128)
    dim_p = _round_up(dim, 128)
    if dim_p > 1536:                       # v7x VMEM budget: W2 will be column-tiled
        dim_p = _round_up(dim_p, 512)
    return d_p, dim_p


def _pick_tn(dim_p):
    return dim_p if dim_p <= 1536 else 512


def _time_embed_kernel(t_ref, table_ref, w1_ref, b1_ref, w2_ref, b2_ref,
                       o_ref, h_ref):
    # t_ref:     VMEM [block_b, 1]    int32
    # table_ref: VMEM [T_p, d_p]      bf16  (resident, single-buffered)
    # w1_ref:    VMEM [d_p, dim_p]    bf16  (resident, single-buffered)
    # b1_ref:    VMEM [1, dim_p]      f32   (resident, single-buffered)
    # w2_ref:    VMEM [dim_p, tn]     bf16
    # b2_ref:    VMEM [1, tn]         f32
    # o_ref:     VMEM [block_b, tn]
    # h_ref:     VMEM scratch [block_b, dim_p] bf16 — SiLU output, reused across j
    j = pl.program_id(1)

    @pl.when(j == 0)
    def _():
        block_b = t_ref.shape[0]
        T_p = table_ref.shape[0]
        # Fused embedding gather as a one-hot matmul on the MXU: x[b, :] = table[t[b], :].
        iota = jax.lax.broadcasted_iota(jnp.int32, (block_b, T_p), 1)
        onehot = jnp.where(iota == t_ref[...], 1.0, 0.0).astype(table_ref.dtype)
        x = jnp.dot(onehot, table_ref[...], preferred_element_type=jnp.float32)
        h = jnp.dot(x.astype(w1_ref.dtype), w1_ref[...],
                    preferred_element_type=jnp.float32) + b1_ref[...]
        # SiLU in f32 (v5e has no bf16 VPU/EUP); EUP sigmoid + VPU mul.
        h = h * jax.nn.sigmoid(h)
        h_ref[...] = h.astype(h_ref.dtype)

    y = jnp.dot(h_ref[...], w2_ref[...],
                preferred_element_type=jnp.float32) + b2_ref[...]
    o_ref[...] = y.astype(o_ref.dtype)


@functools.partial(jax.jit, static_argnames=("dim", "out_dtype", "col_tile"))
def time_embed(t, table, w1, b1, w2, b2, *, dim, out_dtype=jnp.float32, col_tile=None):
    """t: int32 [B]; table/w1/b1/w2/b2 are the *pre-padded* parameters (see TimeEmbeddingPallas)."""
    B = t.shape[0]
    T_p, d_p = table.shape
    dim_p = w1.shape[1]

    tn = col_tile if col_tile is not None else _pick_tn(dim_p)
    assert dim_p % tn == 0
    n_j = dim_p // tn

    SUB = 8
    B_p = _round_up(B, SUB)
    if B_p >= 16:
        # Ensure >=2 grid steps so the "parallel" batch axis can shard across v7x's 2 TCs.
        block_b = min(256, _round_up(B_p // 2, SUB))
    else:
        block_b = B_p
    B_p = _round_up(B_p, block_b)
    n_i = B_p // block_b

    # Only t is padded per call (padded rows gather table row 0; results sliced off).
    t_p = jnp.pad(t, (0, B_p - B)).reshape(B_p, 1)

    out_item = jnp.dtype(out_dtype).itemsize
    flops = 2 * B_p * (T_p * d_p + d_p * dim_p + dim_p * dim_p)
    bytes_accessed = (t_p.size * 4
                      + table.size * table.dtype.itemsize
                      + w1.size * w1.dtype.itemsize
                      + b1.size * 4
                      + w2.size * w2.dtype.itemsize
                      + b2.size * 4
                      + B_p * dim_p * out_item)

    # Single-buffer operands whose block index is constant across the whole grid.
    resident = {"pipeline_mode": pl.Buffered(1)}
    w2_kw = {"pipeline_mode": pl.Buffered(1)} if n_j == 1 else {}

    # VMEM budget: resident weights/table + w2/b2 buffers + double-buffered t/out + h scratch.
    w2_bufs = 1 if n_j == 1 else 2
    vmem_bytes = (2 * block_b * 4
                  + T_p * d_p * 2
                  + d_p * dim_p * 2
                  + dim_p * 4
                  + w2_bufs * (dim_p * tn * 2 + tn * 4)
                  + 2 * block_b * tn * out_item
                  + block_b * dim_p * 2)
    vmem_limit = min(int(vmem_bytes * 1.4) + (4 << 20), 64 << 20)

    out = pl.pallas_call(
        _time_embed_kernel,
        out_shape=jax.ShapeDtypeStruct((B_p, dim_p), out_dtype),
        grid_spec=pltpu.PrefetchScalarGridSpec(
            num_scalar_prefetch=0,
            grid=(n_i, n_j),
            in_specs=[
                pl.BlockSpec((block_b, 1), lambda i, j: (i, 0)),             # t
                pl.BlockSpec((T_p, d_p), lambda i, j: (0, 0), **resident),   # table (resident)
                pl.BlockSpec((d_p, dim_p), lambda i, j: (0, 0), **resident),  # w1 (resident)
                pl.BlockSpec((1, dim_p), lambda i, j: (0, 0), **resident),   # b1 (resident)
                pl.BlockSpec((dim_p, tn), lambda i, j: (0, j), **w2_kw),     # w2 (col-tiled)
                pl.BlockSpec((1, tn), lambda i, j: (0, j), **w2_kw),         # b2
            ],
            out_specs=pl.BlockSpec((block_b, tn), lambda i, j: (i, j)),
            scratch_shapes=[pltpu.VMEM((block_b, dim_p), jnp.bfloat16)],     # h (SiLU output)
        ),
        compiler_params=pltpu.CompilerParams(
            dimension_semantics=("parallel", "arbitrary"),
            vmem_limit_bytes=vmem_limit),
        cost_estimate=pl.CostEstimate(
            flops=flops, transcendentals=B_p * dim_p,
            bytes_accessed=bytes_accessed),
    )(t_p, table, w1, b1, w2, b2)

    return out[:B, :dim]


def make_sinusoidal_table(T, d_model):
    """Exactly mirrors the torch construction (interleaved sin/cos)."""
    assert d_model % 2 == 0
    emb = jnp.arange(0, d_model, 2, dtype=jnp.float32) / float(d_model) * math.log(10000.0)
    emb = jnp.exp(-emb)                                      # [d_model//2]
    pos = jnp.arange(T, dtype=jnp.float32)                   # [T]
    emb = pos[:, None] * emb[None, :]                        # [T, d_model//2]
    emb = jnp.stack([jnp.sin(emb), jnp.cos(emb)], axis=-1)   # [T, d_model//2, 2]
    return emb.reshape(T, d_model)                           # [T, d_model]


def xavier_uniform(key, fan_in, fan_out, dtype=jnp.float32):
    bound = math.sqrt(6.0 / (fan_in + fan_out))
    # stored as [in, out] (transpose of torch's [out, in]) for x @ W
    return jax.random.uniform(key, (fan_in, fan_out), dtype, -bound, bound)


class TimeEmbeddingPallas:
    def __init__(self, key, T, d_model, dim, col_tile=None):
        assert d_model % 2 == 0
        self.T, self.d_model, self.dim = T, d_model, dim
        self.col_tile = col_tile
        k1, k2 = jax.random.split(key)

        d_p, dim_p = _pad_dims(d_model, dim)
        T_p = _round_up(T, 128)

        # Pad ONCE at construction (lane-dense, zero padding is exact); store weights/table in
        # bf16 (halves DMA, native MXU path) and biases in f32 (added after f32 accumulation).
        # NOTE: bf16 table/weights lose a small amount of precision vs torch's f32 module.
        table = make_sinusoidal_table(T, d_model)
        self.table = jnp.pad(table, ((0, T_p - T), (0, d_p - d_model))).astype(jnp.bfloat16)
        w1 = xavier_uniform(k1, d_model, dim)
        self.w1 = jnp.pad(w1, ((0, d_p - d_model), (0, dim_p - dim))).astype(jnp.bfloat16)
        self.b1 = jnp.zeros((1, dim_p), jnp.float32)
        w2 = xavier_uniform(k2, dim, dim)
        self.w2 = jnp.pad(w2, ((0, dim_p - dim), (0, dim_p - dim))).astype(jnp.bfloat16)
        self.b2 = jnp.zeros((1, dim_p), jnp.float32)

    def __call__(self, t):
        t = jnp.clip(t.astype(jnp.int32), 0, self.T - 1)
        return time_embed(t, self.table, self.w1, self.b1, self.w2, self.b2,
                          dim=self.dim, out_dtype=jnp.float32, col_tile=self.col_tile)

    def reference(self, t):
        """Pure-JAX reference mirroring the kernel's dtype handling."""
        t = jnp.clip(t.astype(jnp.int32), 0, self.T - 1)
        x = jnp.take(self.table.astype(jnp.float32)[:self.T, :self.d_model], t, axis=0)
        h = x @ self.w1.astype(jnp.float32)[:self.d_model, :self.dim] + self.b1[:, :self.dim]
        h = h * jax.nn.sigmoid(h)
        h = h.astype(jnp.bfloat16).astype(jnp.float32)
        return h @ self.w2.astype(jnp.float32)[:self.dim, :self.dim] + self.b2[:, :self.dim]


if __name__ == "__main__":
    # Small, lane-dense model dims.
    T, d_model, dim = 16, 128, 128
    B = 8
    key = jax.random.PRNGKey(0)
    k_params, k_t = jax.random.split(key)

    mod = TimeEmbeddingPallas(k_params, T, d_model, dim)
    t = jax.random.randint(k_t, (B,), 0, T, dtype=jnp.int32)

    out = jax.block_until_ready(mod(t))
    ref = mod.reference(t)
    assert out.shape == (B, dim)
    assert jnp.allclose(out, ref, atol=1e-3, rtol=1e-3), \
        float(jnp.max(jnp.abs(out - ref)))

    # Multi-step batch grid (>=2 "parallel" steps) with padded batch rows.
    t3 = jax.random.randint(jax.random.PRNGKey(3), (20,), 0, T, dtype=jnp.int32)
    out3 = jax.block_until_ready(mod(t3))
    ref3 = mod.reference(t3)
    assert out3.shape == (20, dim)
    assert jnp.allclose(out3, ref3, atol=1e-3, rtol=1e-3), \
        float(jnp.max(jnp.abs(out3 - ref3)))

    # Padding path: non-multiple-of-128 feature dims, non-multiple-of-8 batch.
    mod2 = TimeEmbeddingPallas(jax.random.PRNGKey(1), 16, 32, 48)
    t2 = jax.random.randint(jax.random.PRNGKey(2), (5,), 0, 16, dtype=jnp.int32)
    out2 = jax.block_until_ready(mod2(t2))
    ref2 = mod2.reference(t2)
    assert out2.shape == (5, 48)
    assert jnp.allclose(out2, ref2, atol=1e-3, rtol=1e-3), \
        float(jnp.max(jnp.abs(out2 - ref2)))

    # Column-tiled W2 path (n_j > 1) exercised at small shape via explicit col_tile.
    mod4 = TimeEmbeddingPallas(jax.random.PRNGKey(4), 16, 64, 256, col_tile=128)
    t4 = jax.random.randint(jax.random.PRNGKey(5), (12,), 0, 16, dtype=jnp.int32)
    out4 = jax.block_until_ready(mod4(t4))
    ref4 = mod4.reference(t4)
    assert out4.shape == (12, 256)
    assert jnp.allclose(out4, ref4, atol=1e-3, rtol=1e-3), \
        float(jnp.max(jnp.abs(out4 - ref4)))

    print("KERNEL_OK")
</pallas_src>

<mosaic_0001>
module attributes {stable_mosaic.version = 11 : i64} {
  func.func @_time_embed_kernel(%arg0: i32, %arg1: i32, %arg2: memref<8x1xi32, #tpu.memory_space<vmem>>, %arg3: memref<128x128xbf16, #tpu.memory_space<vmem>>, %arg4: memref<128x128xbf16, #tpu.memory_space<vmem>>, %arg5: memref<1x128xf32, #tpu.memory_space<vmem>>, %arg6: memref<128x128xbf16, #tpu.memory_space<vmem>>, %arg7: memref<1x128xf32, #tpu.memory_space<vmem>>, %arg8: memref<8x128xf32, #tpu.memory_space<vmem>>, %arg9: memref<8x128xbf16, #tpu.memory_space<vmem>>) attributes {dimension_semantics = [#tpu.dimension_semantics<parallel>, #tpu.dimension_semantics<arbitrary>], iteration_bounds = array<i64: 1, 1>, scalar_prefetch = 0 : i64, scratch_operands = 1 : i64, tpu.core_type = #tpu.core_type<tc>, window_params = [{transform_indices = @transform_0, window_bounds = array<i64: 8, 1>}, {pipeline_mode = #tpu.pipeline_mode<synchronous>, transform_indices = @transform_1, window_bounds = array<i64: 128, 128>}, {pipeline_mode = #tpu.pipeline_mode<synchronous>, transform_indices = @transform_2, window_bounds = array<i64: 128, 128>}, {pipeline_mode = #tpu.pipeline_mode<synchronous>, transform_indices = @transform_3, window_bounds = array<i64: 1, 128>}, {pipeline_mode = #tpu.pipeline_mode<synchronous>, transform_indices = @transform_4, window_bounds = array<i64: 128, 128>}, {pipeline_mode = #tpu.pipeline_mode<synchronous>, transform_indices = @transform_5, window_bounds = array<i64: 1, 128>}, {transform_indices = @transform_6, window_bounds = array<i64: 8, 128>}]} {
    %c0_i32 = arith.constant 0 : i32
    %0 = arith.cmpi eq, %arg1, %c0_i32 : i32
    %1 = arith.extui %0 : i1 to i32
    %c0_i32_0 = arith.constant 0 : i32
    %2 = arith.cmpi ne, %1, %c0_i32_0 : i32
    scf.if %2 {
      %10 = tpu.iota {dimensions = array<i32: 1>} : vector<8x128xi32>
      %c0_8 = arith.constant 0 : index
      %c0_9 = arith.constant 0 : index
      %11 = vector.load %arg2[%c0_8, %c0_9] : memref<8x1xi32, #tpu.memory_space<vmem>>, vector<8x1xi32>
      %12 = vector.broadcast %11 : vector<8x1xi32> to vector<8x128xi32>
      %13 = arith.cmpi eq, %10, %12 : vector<8x128xi32>
      %cst_10 = arith.constant 1.000000e+00 : f32
      %cst_11 = arith.constant 0.000000e+00 : f32
      %14 = vector.broadcast %cst_10 : f32 to vector<8x128xf32>
      %15 = vector.broadcast %cst_11 : f32 to vector<8x128xf32>
      %16 = arith.select %13, %14, %15 : vector<8x128xi1>, vector<8x128xf32>
      %17 = arith.truncf %16 : vector<8x128xf32> to vector<8x128xbf16>
      %c0_12 = arith.constant 0 : index
      %c0_13 = arith.constant 0 : index
      %18 = vector.load %arg3[%c0_12, %c0_13] : memref<128x128xbf16, #tpu.memory_space<vmem>>, vector<128x128xbf16>
      %cst_14 = arith.constant dense<0.000000e+00> : vector<8x128xf32>
      %19 = tpu.matmul %17, %18, %cst_14 {dimension_numbers = #tpu.dot_dimension_numbers<[1], [0], [0], [1], [0, 0, 1, 1], [], []>} : vector<8x128xbf16>, vector<128x128xbf16>, vector<8x128xf32> -> vector<8x128xf32>
      %20 = arith.truncf %19 : vector<8x128xf32> to vector<8x128xbf16>
      %c0_15 = arith.constant 0 : index
      %c0_16 = arith.constant 0 : index
      %21 = vector.load %arg4[%c0_15, %c0_16] : memref<128x128xbf16, #tpu.memory_space<vmem>>, vector<128x128xbf16>
      %cst_17 = arith.constant dense<0.000000e+00> : vector<8x128xf32>
      %22 = tpu.matmul %20, %21, %cst_17 {dimension_numbers = #tpu.dot_dimension_numbers<[1], [0], [0], [1], [0, 0, 1, 1], [], []>} : vector<8x128xbf16>, vector<128x128xbf16>, vector<8x128xf32> -> vector<8x128xf32>
      %c0_18 = arith.constant 0 : index
      %c0_19 = arith.constant 0 : index
      %23 = vector.load %arg5[%c0_18, %c0_19] : memref<1x128xf32, #tpu.memory_space<vmem>>, vector<1x128xf32>
      %24 = vector.broadcast %23 : vector<1x128xf32> to vector<8x128xf32>
      %25 = arith.addf %22, %24 : vector<8x128xf32>
      %26 = arith.negf %25 : vector<8x128xf32>
      %27 = math.exp %26 : vector<8x128xf32>
      %cst_20 = arith.constant 1.000000e+00 : f32
      %28 = vector.broadcast %cst_20 : f32 to vector<8x128xf32>
      %29 = arith.addf %28, %27 : vector<8x128xf32>
      %30 = arith.divf %28, %29 : vector<8x128xf32>
      %31 = arith.mulf %25, %30 : vector<8x128xf32>
      %32 = arith.truncf %31 : vector<8x128xf32> to vector<8x128xbf16>
      %c0_21 = arith.constant 0 : index
      %c0_22 = arith.constant 0 : index
      %33 = vector.load %arg9[%c0_21, %c0_22] : memref<8x128xbf16, #tpu.memory_space<vmem>>, vector<8x128xbf16>
      tpu.vector_store %arg9[%c0_21, %c0_22], %32 {strides = array<i32>} : memref<8x128xbf16, #tpu.memory_space<vmem>>, vector<8x128xbf16>,
    } else {
    }
    %c0 = arith.constant 0 : index
    %c0_1 = arith.constant 0 : index
    %3 = vector.load %arg9[%c0, %c0_1] : memref<8x128xbf16, #tpu.memory_space<vmem>>, vector<8x128xbf16>
    %c0_2 = arith.constant 0 : index
    %c0_3 = arith.constant 0 : index
    %4 = vector.load %arg6[%c0_2, %c0_3] : memref<128x128xbf16, #tpu.memory_space<vmem>>, vector<128x128xbf16>
    %cst = arith.constant dense<0.000000e+00> : vector<8x128xf32>
    %5 = tpu.matmul %3, %4, %cst {dimension_numbers = #tpu.dot_dimension_numbers<[1], [0], [0], [1], [0, 0, 1, 1], [], []>} : vector<8x128xbf16>, vector<128x128xbf16>, vector<8x128xf32> -> vector<8x128xf32>
    %c0_4 = arith.constant 0 : index
    %c0_5 = arith.constant 0 : index
    %6 = vector.load %arg7[%c0_4, %c0_5] : memref<1x128xf32, #tpu.memory_space<vmem>>, vector<1x128xf32>
    %7 = vector.broadcast %6 : vector<1x128xf32> to vector<8x128xf32>
    %8 = arith.addf %5, %7 : vector<8x128xf32>
    %c0_6 = arith.constant 0 : index
    %c0_7 = arith.constant 0 : index
    %9 = vector.load %arg8[%c0_6, %c0_7] : memref<8x128xf32, #tpu.memory_space<vmem>>, vector<8x128xf32>
    tpu.vector_store %arg8[%c0_6, %c0_7], %8 {strides = array<i32>} : memref<8x128xf32, #tpu.memory_space<vmem>>, vector<8x128xf32>,
    return
  }
  func.func @transform_0(%arg0: i32, %arg1: i32) -> (i32, i32) {
    %c0_i32 = arith.constant 0 : i32
    %c0_i32_0 = arith.constant 0 : i32
    return %arg0, %c0_i32 : i32, i32
  }
  func.func @transform_1(%arg0: i32, %arg1: i32) -> (i32, i32) {
    %c0_i32 = arith.constant 0 : i32
    %c0_i32_0 = arith.constant 0 : i32
    %c0_i32_1 = arith.constant 0 : i32
    return %c0_i32, %c0_i32_0 : i32, i32
  }
  func.func @transform_2(%arg0: i32, %arg1: i32) -> (i32, i32) {
    %c0_i32 = arith.constant 0 : i32
    %c0_i32_0 = arith.constant 0 : i32
    %c0_i32_1 = arith.constant 0 : i32
    return %c0_i32, %c0_i32_0 : i32, i32
  }
  func.func @transform_3(%arg0: i32, %arg1: i32) -> (i32, i32) {
    %c0_i32 = arith.constant 0 : i32
    %c0_i32_0 = arith.constant 0 : i32
    %c0_i32_1 = arith.constant 0 : i32
    return %c0_i32, %c0_i32_0 : i32, i32
  }
  func.func @transform_4(%arg0: i32, %arg1: i32) -> (i32, i32) {
    %c0_i32 = arith.constant 0 : i32
    %c0_i32_0 = arith.constant 0 : i32
    return %c0_i32, %arg1 : i32, i32
  }
  func.func @transform_5(%arg0: i32, %arg1: i32) -> (i32, i32) {
    %c0_i32 = arith.constant 0 : i32
    %c0_i32_0 = arith.constant 0 : i32
    return %c0_i32, %arg1 : i32, i32
  }
  func.func @transform_6(%arg0: i32, %arg1: i32) -> (i32, i32) {
    %c0_i32 = arith.constant 0 : i32
    return %arg0, %arg1 : i32, i32
  }
}

</mosaic_0001>

<llo_original>
// kernel: time_embed.1
$region0: #{time_embed.1}
  #allocation0 [shape = 'u32[]', space=smem, size = 0x4, offset = 0x4, fixed_abs, tag = 'smem constant byte address 0x4 - core index']
  #allocation1 [shape = 'u32[144,128]{1,0:T(1,128)}', space=vmem, size = 0x12000, scoped, tag = 'internal scratch']
  #allocation2 [shape = 'bf16[8,128]{1,0:T(8,128)(2,1)}', space=vmem, size = 0x800, scoped, tag = 'scratch operand']
  %s0 = inlined_call_operand.vmem [shape: s32[8,1], index: 0, kind: input, shape index: {}]
  %s1 = inlined_call_operand.hbm [shape: bf16[128,128], index: 1, kind: input, shape index: {}]
  %s2 = inlined_call_operand.hbm [shape: bf16[128,128], index: 2, kind: input, shape index: {}]
  %s3 = inlined_call_operand.vmem [shape: f32[1,128], index: 3, kind: input, shape index: {}]
  %s4 = inlined_call_operand.hbm [shape: bf16[128,128], index: 4, kind: input, shape index: {}]
  %s5 = inlined_call_operand.vmem [shape: f32[1,128], index: 5, kind: input, shape index: {}]
  %s6 = inlined_call_operand.hbm [shape: f32[8,128], index: 6, kind: output, shape index: {}]
  %s7 = sld [smem:[#allocation0]]
  $region50: #{time_embed.1} parent=0
    _
  %s9 = ssub.s32 1, %s7
  %s10 = scalar_select 0, %s9, %s7
  $region1: #{time_embed.1} parent=0
    #allocation3 [shape = 'u8[32768]{0}', space=vmem, size = 0x8000, scoped, tag = 'input window, operand 1, single buffered']
    #allocation4 [shape = 's32[1]{0}', space=sflag, size = 0x4, scoped, tag = 'scoped memory for time_embed.1']
    #allocation5 [shape = 's32[1]{0}', space=sflag, size = 0x4, scoped, tag = 'scoped memory for time_embed.1']
    #allocation6 [shape = 'u8[32768]{0}', space=vmem, size = 0x8000, scoped, tag = 'input window, operand 2, single buffered']
    #allocation7 [shape = 's32[1]{0}', space=sflag, size = 0x4, scoped, tag = 'scoped memory for time_embed.1']
    #allocation8 [shape = 'u8[32768]{0}', space=vmem, size = 0x8000, scoped, tag = 'input window, operand 4, single buffered']
    #allocation9 [shape = 'u8[4096]{0}', space=vmem, size = 0x1000, scoped, tag = 'output window, operand 0, single buffered']
    %11 = vsyncpa [#allocation4], 0
    %12 = vsyncpa [#allocation7], 0
    %13 = vsyncpa [#allocation5], 0
    // Predicated region
    $region2: #{time_embed.1} parent=1 // pred_check
      _
    $region3: #{time_embed.1} parent=1 // pred_check_branch
      %15 = sbr.rel (0) target = $region5
    $region4: #{time_embed.1} parent=1 // pred_region
      _
    $region5: #{time_embed.1} parent=1 // pred_fallthru
      _
    // Predicated region
    $region6: #{time_embed.1} parent=1 // pred_check
      _
    $region7: #{time_embed.1} parent=1 // pred_check_branch
      %17 = sbr.rel (0) target = $region9
    $region8: #{time_embed.1} parent=1 // pred_region
      %s19 = ssub.s32 1024, 1024
      %20 = vsyncadd [#allocation4], %s19
      %s21 = sshll.u32 [#allocation3], 4
      %s22 = int_to_ptr.vmem [resolvable:$true] %s21
      %27 = dma.hbm_to_vmem [thread:$0]  %s1, 1024, %s22, [#allocation4], 64, 64, 4
    $region9: #{time_embed.1} parent=1 // pred_fallthru
      _
    // Predicated region
    $region10: #{time_embed.1} parent=1 // pred_check
      _
    $region11: #{time_embed.1} parent=1 // pred_check_branch
      %29 = sbr.rel (0) target = $region13
    $region12: #{time_embed.1} parent=1 // pred_region
      %s31 = ssub.s32 1024, 1024
      %32 = vsyncadd [#allocation7], %s31
      %s33 = sshll.u32 [#allocation6], 4
      %s34 = int_to_ptr.vmem [resolvable:$true] %s33
      %39 = dma.hbm_to_vmem [thread:$0]  %s2, 1024, %s34, [#allocation7], 64, 64, 4
    $region13: #{time_embed.1} parent=1 // pred_fallthru
      _
    // Predicated region
    $region14: #{time_embed.1} parent=1 // pred_check
      _
    $region15: #{time_embed.1} parent=1 // pred_check_branch
      %41 = sbr.rel (0) target = $region17
    $region16: #{time_embed.1} parent=1 // pred_region
      _
    $region17: #{time_embed.1} parent=1 // pred_fallthru
      _
    // Predicated region
    $region18: #{time_embed.1} parent=1 // pred_check
      _
    $region19: #{time_embed.1} parent=1 // pred_check_branch
      %43 = sbr.rel (0) target = $region21
    $region20: #{time_embed.1} parent=1 // pred_region
      %s45 = ssub.s32 1024, 1024
      %46 = vsyncadd [#allocation7], %s45
      %s47 = sshll.u32 [#allocation8], 4
      %s48 = int_to_ptr.vmem [resolvable:$true] %s47
      %53 = dma.hbm_to_vmem [thread:$0]  %s4, 1024, %s48, [#allocation7], 64, 64, 4
    $region21: #{time_embed.1} parent=1 // pred_fallthru
      _
    // Predicated region
    $region22: #{time_embed.1} parent=1 // pred_check
      _
    $region23: #{time_embed.1} parent=1 // pred_check_branch
      %55 = sbr.rel (0) target = $region25
    $region24: #{time_embed.1} parent=1 // pred_region
      _
    $region25: #{time_embed.1} parent=1 // pred_fallthru
      _
    // Predicated region
    $region26: #{time_embed.1} parent=1 // pred_check
      _
    $region27: #{time_embed.1} parent=1 // pred_check_branch
      %57 = sbr.rel (0) target = $region29
    $region28: #{time_embed.1} parent=1 // pred_region
      %58 = dma.done [#allocation4], 1024
    $region29: #{time_embed.1} parent=1 // pred_fallthru
      _
    // Predicated region
    $region30: #{time_embed.1} parent=1 // pred_check
      _
    $region31: #{time_embed.1} parent=1 // pred_check_branch
      %60 = sbr.rel (0) target = $region33
    $region32: #{time_embed.1} parent=1 // pred_region
      %61 = dma.done [#allocation7], 1024
    $region33: #{time_embed.1} parent=1 // pred_fallthru
      _
    // Predicated region
    $region34: #{time_embed.1} parent=1 // pred_check
      _
    $region35: #{time_embed.1} parent=1 // pred_check_branch
      %63 = sbr.rel (0) target = $region37
    $region36: #{time_embed.1} parent=1 // pred_region
      %64 = dma.done [#allocation7], 1024
    $region37: #{time_embed.1} parent=1 // pred_fallthru
      _
    %p66 = scmp.eq.s32.totalorder 0, 0
    // Predicated region
    $region38: #{time_embed.1} parent=1 // pred_check
      %p67 = pneg %p66
    $region39: #{time_embed.1} parent=1 // pred_check_branch
      %69 = sbr.rel (%p67) target = $region41
    $region40: #{time_embed.1} parent=1 // pred_region
      %v70 = vlaneseq
      %v71 = vand.u32 %v70, 127
      %v72 = vld [vmem:[%s0] sm:$0xff]
      %73 = vset.pattern.permute.xlu0 0
      %74 = vperm.xlu0 %73, %v72
      %v75 = vpop.permute.xlu0 %74
      %vm76 = vcmp.eq.s32.totalorder %v71, %v75
      %v77 = vsel %vm76, 1.0, 0.0
      %v78 = vpack.c.bf16 %v77, %v77
      %v79 = vld [vmem:[#allocation3] sm:$0xf]
      %v80 = vld [vmem:[#allocation3 + $0x4] sm:$0xf]
      %v81 = vld [vmem:[#allocation3 + $0x8] sm:$0xf]
      %v82 = vld [vmem:[#allocation3 + $0xc] sm:$0xf]
      %v83 = vld [vmem:[#allocation3 + $0x10] sm:$0xf]
      %v84 = vld [vmem:[#allocation3 + $0x14] sm:$0xf]
      %v85 = vld [vmem:[#allocation3 + $0x18] sm:$0xf]
      %v86 = vld [vmem:[#allocation3 + $0x1c] sm:$0xf]
      %v87 = vld [vmem:[#allocation3 + $0x20] sm:$0xf]
      %v88 = vld [vmem:[#allocation3 + $0x24] sm:$0xf]
      %v89 = vld [vmem:[#allocation3 + $0x28] sm:$0xf]
      %v90 = vld [vmem:[#allocation3 + $0x2c] sm:$0xf]
      %v91 = vld [vmem:[#allocation3 + $0x30] sm:$0xf]
      %v92 = vld [vmem:[#allocation3 + $0x34] sm:$0xf]
      %v93 = vld [vmem:[#allocation3 + $0x38] sm:$0xf]
      %v94 = vld [vmem:[#allocation3 + $0x3c] sm:$0xf]
      %v111 = vunpack.c.l.b16 %v79
      %v112 = vunpack.c.l.b16 %v80
      %v113 = vunpack.c.l.b16 %v81
      %v114 = vunpack.c.l.b16 %v82
      %v115 = vunpack.c.l.b16 %v83
      %v116 = vunpack.c.l.b16 %v84
      %v117 = vunpack.c.l.b16 %v85
      %v118 = vunpack.c.l.b16 %v86
      %v119 = vunpack.c.l.b16 %v87
      %v120 = vunpack.c.l.b16 %v88
      %v121 = vunpack.c.l.b16 %v89
      %v122 = vunpack.c.l.b16 %v90
      %v123 = vunpack.c.l.b16 %v91
      %v124 = vunpack.c.l.b16 %v92
      %v125 = vunpack.c.l.b16 %v93
      %v126 = vunpack.c.l.b16 %v94
      %v127 = vpack.c.b16 %v112, %v111
      %v128 = vpack.c.b16 %v114, %v113
      %v129 = vpack.c.b16 %v116, %v115
      %v130 = vpack.c.b16 %v118, %v117
      %v131 = vpack.c.b16 %v120, %v119
      %v132 = vpack.c.b16 %v122, %v121
      %v133 = vpack.c.b16 %v124, %v123
      %v134 = vpack.c.b16 %v126, %v125
      %143 = vmatprep.subr.bf16.mxu0 0
      %144 = vmatpush1.bf16.msra.mxu0 %v127
      %145 = vmatprep.subr.bf16.mxu0 0
      %146 = vmatpush1.bf16.msra.mxu0 %v128
      %147 = vmatprep.subr.bf16.mxu0 0
      %148 = vmatpush1.bf16.msra.mxu0 %v129
      %149 = vmatprep.subr.bf16.mxu0 0
      %150 = vmatpush1.bf16.msra.mxu0 %v130
      %151 = vmatprep.subr.bf16.mxu0 0
      %152 = vmatpush1.bf16.msra.mxu0 %v131
      %153 = vmatprep.subr.bf16.mxu0 0
      %154 = vmatpush1.bf16.msra.mxu0 %v132
      %155 = vmatprep.subr.bf16.mxu0 0
      %156 = vmatpush1.bf16.msra.mxu0 %v133
      %157 = vmatprep.subr.bf16.mxu0 0
      %158 = vmatpush1.bf16.msra.mxu0 %v134
      %159 = vmatprep.subr.bf16.mxu0 0
      %160 = vmatpush1.bf16.msra.mxu0 0
      %161 = vmatprep.subr.bf16.mxu0 0
      %162 = vmatpush1.bf16.msra.mxu0 0
      %163 = vmatprep.subr.bf16.mxu0 0
      %164 = vmatpush1.bf16.msra.mxu0 0
      %165 = vmatprep.subr.bf16.mxu0 0
      %166 = vmatpush1.bf16.msra.mxu0 0
      %167 = vmatprep.subr.bf16.mxu0 0
      %168 = vmatpush1.bf16.msra.mxu0 0
      %169 = vmatprep.subr.bf16.mxu0 0
      %170 = vmatpush1.bf16.msra.mxu0 0
      %171 = vmatprep.subr.bf16.mxu0 0
      %172 = vmatpush1.bf16.msra.mxu0 0
      %173 = vmatprep.subr.bf16.mxu0 0
      %174 = vmatpush1.bf16.msra.mxu0 0
      %175 = vmatprep.mubr.bf16.mxu0 0
      %176 = vmatmul.mubr.bf16.gmra.mrb[0].mxu0 %v78
      %v177 = vpop.f32.mrb[0].mxu0
      %v178 = vadd.f32 0.0, %v177
      %v179 = vpop.f32.mrb[0].mxu0
      %v180 = vpop.f32.mrb[0].mxu0
      %v181 = vpop.f32.mrb[0].mxu0
      %182 = vdwg.mxu0
      %v183 = vpack.c.bf16 %v178, %v178
      %v184 = vld [vmem:[#allocation6] sm:$0xf]
      %v185 = vld [vmem:[#allocation6 + $0x4] sm:$0xf]
      %v186 = vld [vmem:[#allocation6 + $0x8] sm:$0xf]
      %v187 = vld [vmem:[#allocation6 + $0xc] sm:$0xf]
      %v188 = vld [vmem:[#allocation6 + $0x10] sm:$0xf]
      %v189 = vld [vmem:[#allocation6 + $0x14] sm:$0xf]
      %v190 = vld [vmem:[#allocation6 + $0x18] sm:$0xf]
      %v191 = vld [vmem:[#allocation6 + $0x1c] sm:$0xf]
      %v192 = vld [vmem:[#allocation6 + $0x20] sm:$0xf]
      %v193 = vld [vmem:[#allocation6 + $0x24] sm:$0xf]
      %v194 = vld [vmem:[#allocation6 + $0x28] sm:$0xf]
      %v195 = vld [vmem:[#allocation6 + $0x2c] sm:$0xf]
      %v196 = vld [vmem:[#allocation6 + $0x30] sm:$0xf]
      %v197 = vld [vmem:[#allocation6 + $0x34] sm:$0xf]
      %v198 = vld [vmem:[#allocation6 + $0x38] sm:$0xf]
      %v199 = vld [vmem:[#allocation6 + $0x3c] sm:$0xf]
      %v200 = vld [vmem:[%s3] sm:$0x1]
      %v202 = vlaneseq
      %v203 = vshrl.u32 %v202, 7
      %v204 = vsub.s32 0, %v203
      %v205 = vrot.slane %v200, %v204
      %v223 = vunpack.c.l.b16 %v184
      %v224 = vunpack.c.l.b16 %v185
      %v225 = vunpack.c.l.b16 %v186
      %v226 = vunpack.c.l.b16 %v187
      %v227 = vunpack.c.l.b16 %v188
      %v228 = vunpack.c.l.b16 %v189
      %v229 = vunpack.c.l.b16 %v190
      %v230 = vunpack.c.l.b16 %v191
      %v231 = vunpack.c.l.b16 %v192
      %v232 = vunpack.c.l.b16 %v193
      %v233 = vunpack.c.l.b16 %v194
      %v234 = vunpack.c.l.b16 %v195
      %v235 = vunpack.c.l.b16 %v196
      %v236 = vunpack.c.l.b16 %v197
      %v237 = vunpack.c.l.b16 %v198
      %v238 = vunpack.c.l.b16 %v199
      %v239 = vpack.c.b16 %v224, %v223
      %v240 = vpack.c.b16 %v226, %v225
      %v241 = vpack.c.b16 %v228, %v227
      %v242 = vpack.c.b16 %v230, %v229
      %v243 = vpack.c.b16 %v232, %v231
      %v244 = vpack.c.b16 %v234, %v233
      %v245 = vpack.c.b16 %v236, %v235
      %v246 = vpack.c.b16 %v238, %v237
      %255 = vmatprep.subr.bf16.mxu0 0
      %256 = vmatpush1.bf16.msra.mxu0 %v239
      %257 = vmatprep.subr.bf16.mxu0 0
      %258 = vmatpush1.bf16.msra.mxu0 %v240
      %259 = vmatprep.subr.bf16.mxu0 0
      %260 = vmatpush1.bf16.msra.mxu0 %v241
      %261 = vmatprep.subr.bf16.mxu0 0
      %262 = vmatpush1.bf16.msra.mxu0 %v242
      %263 = vmatprep.subr.bf16.mxu0 0
      %264 = vmatpush1.bf16.msra.mxu0 %v243
      %265 = vmatprep.subr.bf16.mxu0 0
      %266 = vmatpush1.bf16.msra.mxu0 %v244
      %267 = vmatprep.subr.bf16.mxu0 0
      %268 = vmatpush1.bf16.msra.mxu0 %v245
      %269 = vmatprep.subr.bf16.mxu0 0
      %270 = vmatpush1.bf16.msra.mxu0 %v246
      %271 = vmatprep.subr.bf16.mxu0 0
      %272 = vmatpush1.bf16.msra.mxu0 0
      %273 = vmatprep.subr.bf16.mxu0 0
      %274 = vmatpush1.bf16.msra.mxu0 0
      %275 = vmatprep.subr.bf16.mxu0 0
      %276 = vmatpush1.bf16.msra.mxu0 0
      %277 = vmatprep.subr.bf16.mxu0 0
      %278 = vmatpush1.bf16.msra.mxu0 0
      %279 = vmatprep.subr.bf16.mxu0 0
      %280 = vmatpush1.bf16.msra.mxu0 0
      %281 = vmatprep.subr.bf16.mxu0 0
      %282 = vmatpush1.bf16.msra.mxu0 0
      %283 = vmatprep.subr.bf16.mxu0 0
      %284 = vmatpush1.bf16.msra.mxu0 0
      %285 = vmatprep.subr.bf16.mxu0 0
      %286 = vmatpush1.bf16.msra.mxu0 0
      %287 = vmatprep.mubr.bf16.mxu0 0
      %288 = vmatmul.mubr.bf16.gmra.mrb[0].mxu0 %v183
      %v289 = vpop.f32.mrb[0].mxu0
      %v290 = vadd.f32 %v205, %v289
      %v291 = vpop.f32.mrb[0].mxu0
      %v292 = vpop.f32.mrb[0].mxu0
      %v293 = vpop.f32.mrb[0].mxu0
      %294 = vdwg.mxu0
      %v295 = vxor.u32 %v290, 2147483648
      %v296 = vmul.f32 %v295, 1.442695
      %v297 = vpow.pop %v296
      %v298 = vadd.f32 %v297, 1.0
      %v299 = vrcp.pop %v298
      %v300 = vmul.f32 1.0, %v299
      %v301 = vmul.f32 %v290, %v300
      %v302 = vpack.c.bf16 %v301, %v301
      %303 = vst [vmem:[#allocation2] sm:$0xf] %v302
    $region41: #{time_embed.1} parent=1 // pred_fallthru
      _
    %v304 = vld [vmem:[#allocation2] sm:$0xf]
    %v305 = vld [vmem:[#allocation8] sm:$0xf]
    %v306 = vld [vmem:[#allocation8 + $0x4] sm:$0xf]
    %v307 = vld [vmem:[#allocation8 + $0x8] sm:$0xf]
    %v308 = vld [vmem:[#allocation8 + $0xc] sm:$0xf]
    %v309 = vld [vmem:[#allocation8 + $0x10] sm:$0xf]
    %v310 = vld [vmem:[#allocation8 + $0x14] sm:$0xf]
    %v311 = vld [vmem:[#allocation8 + $0x18] sm:$0xf]
    %v312 = vld [vmem:[#allocation8 + $0x1c] sm:$0xf]
    %v313 = vld [vmem:[#allocation8 + $0x20] sm:$0xf]
    %v314 = vld [vmem:[#allocation8 + $0x24] sm:$0xf]
    %v315 = vld [vmem:[#allocation8 + $0x28] sm:$0xf]
    %v316 = vld [vmem:[#allocation8 + $0x2c] sm:$0xf]
    %v317 = vld [vmem:[#allocation8 + $0x30] sm:$0xf]
    %v318 = vld [vmem:[#allocation8 + $0x34] sm:$0xf]
    %v319 = vld [vmem:[#allocation8 + $0x38] sm:$0xf]
    %v320 = vld [vmem:[#allocation8 + $0x3c] sm:$0xf]
    %v321 = vld [vmem:[%s5] sm:$0x1]
    %v323 = vlaneseq
    %v324 = vshrl.u32 %v323, 7
    %v325 = vsub.s32 0, %v324
    %v326 = vrot.slane %v321, %v325
    %v344 = vunpack.c.l.b16 %v305
    %v345 = vunpack.c.l.b16 %v306
    %v346 = vunpack.c.l.b16 %v307
    %v347 = vunpack.c.l.b16 %v308
    %v348 = vunpack.c.l.b16 %v309
    %v349 = vunpack.c.l.b16 %v310
    %v350 = vunpack.c.l.b16 %v311
    %v351 = vunpack.c.l.b16 %v312
    %v352 = vunpack.c.l.b16 %v313
    %v353 = vunpack.c.l.b16 %v314
    %v354 = vunpack.c.l.b16 %v315
    %v355 = vunpack.c.l.b16 %v316
    %v356 = vunpack.c.l.b16 %v317
    %v357 = vunpack.c.l.b16 %v318
    %v358 = vunpack.c.l.b16 %v319
    %v359 = vunpack.c.l.b16 %v320
    %v360 = vpack.c.b16 %v345, %v344
    %v361 = vpack.c.b16 %v347, %v346
    %v362 = vpack.c.b16 %v349, %v348
    %v363 = vpack.c.b16 %v351, %v350
    %v364 = vpack.c.b16 %v353, %v352
    %v365 = vpack.c.b16 %v355, %v354
    %v366 = vpack.c.b16 %v357, %v356
    %v367 = vpack.c.b16 %v359, %v358
    %376 = vmatprep.subr.bf16.mxu0 0
    %377 = vmatpush1.bf16.msra.mxu0 %v360
    %378 = vmatprep.subr.bf16.mxu0 0
    %379 = vmatpush1.bf16.msra.mxu0 %v361
    %380 = vmatprep.subr.bf16.mxu0 0
    %381 = vmatpush1.bf16.msra.mxu0 %v362
    %382 = vmatprep.subr.bf16.mxu0 0
    %383 = vmatpush1.bf16.msra.mxu0 %v363
    %384 = vmatprep.subr.bf16.mxu0 0
    %385 = vmatpush1.bf16.msra.mxu0 %v364
    %386 = vmatprep.subr.bf16.mxu0 0
    %387 = vmatpush1.bf16.msra.mxu0 %v365
    %388 = vmatprep.subr.bf16.mxu0 0
    %389 = vmatpush1.bf16.msra.mxu0 %v366
    %390 = vmatprep.subr.bf16.mxu0 0
    %391 = vmatpush1.bf16.msra.mxu0 %v367
    %392 = vmatprep.subr.bf16.mxu0 0
    %393 = vmatpush1.bf16.msra.mxu0 0
    %394 = vmatprep.subr.bf16.mxu0 0
    %395 = vmatpush1.bf16.msra.mxu0 0
    %396 = vmatprep.subr.bf16.mxu0 0
    %397 = vmatpush1.bf16.msra.mxu0 0
    %398 = vmatprep.subr.bf16.mxu0 0
    %399 = vmatpush1.bf16.msra.mxu0 0
    %400 = vmatprep.subr.bf16.mxu0 0
    %401 = vmatpush1.bf16.msra.mxu0 0
    %402 = vmatprep.subr.bf16.mxu0 0
    %403 = vmatpush1.bf16.msra.mxu0 0
    %404 = vmatprep.subr.bf16.mxu0 0
    %405 = vmatpush1.bf16.msra.mxu0 0
    %406 = vmatprep.subr.bf16.mxu0 0
    %407 = vmatpush1.bf16.msra.mxu0 0
    %408 = vmatprep.mubr.bf16.mxu0 0
    %409 = vmatmul.mubr.bf16.gmra.mrb[0].mxu0 %v304
    %v410 = vpop.f32.mrb[0].mxu0
    %v411 = vadd.f32 %v326, %v410
    %v412 = vpop.f32.mrb[0].mxu0
    %v413 = vpop.f32.mrb[0].mxu0
    %v414 = vpop.f32.mrb[0].mxu0
    %415 = vdwg.mxu0
    %416 = vst [vmem:[#allocation9] sm:$0xff] %v411
    // Predicated region
    $region42: #{time_embed.1} parent=1 // pred_check
      _
    $region43: #{time_embed.1} parent=1 // pred_check_branch
      %418 = sbr.rel (0) target = $region45
    $region44: #{time_embed.1} parent=1 // pred_region
      %s420 = ssub.s32 128, 128
      %421 = vsyncadd [#allocation5], %s420
      %s423 = sshll.u32 [#allocation9], 4
      %s424 = int_to_ptr.vmem [resolvable:$true] %s423
      %426 = dma.vmem_to_hbm [thread:$0]  %s424, 128, %s6, [#allocation5]
    $region45: #{time_embed.1} parent=1 // pred_fallthru
      _
    // Predicated region
    $region46: #{time_embed.1} parent=1 // pred_check
      _
    $region47: #{time_embed.1} parent=1 // pred_check_branch
      %428 = sbr.rel (0) target = $region49
    $region48: #{time_embed.1} parent=1 // pred_region
      %429 = dma.done [#allocation5], 128
    $region49: #{time_embed.1} parent=1 // pred_fallthru
      _
    %430 = vsyncpa [#allocation4], 1
    %431 = vsyncpa [#allocation7], 1
    %432 = vsyncpa [#allocation5], 1

</llo_original>
